<compile_context>
chip_gen: v5e
topology: v5e:2x2
jax: 0.10.0
libtpu: 0.0.40
codegen_flags: <defaults>
</compile_context>

<pallas_src>
import functools

import jax
import jax.numpy as jnp
from jax.experimental import pallas as pl
from jax.experimental.pallas import tpu as pltpu

NUM_FEAT = 6
HID_FEAT = 64                    # per-feature hidden size of fc_X1
HID_CAT = NUM_FEAT * HID_FEAT    # 384
HID2 = 64                        # fc1 output
FEAT_PAD = 8                     # input columns padded 6 -> 8
LANE = 128


def _round_up(x, m):
    return (x + m - 1) // m * m


def mlp6_kernel(data_ref, wf_ref, bf_ref, w1_ref, b1_ref, w2_ref, b2_ref, out_ref):
    data = data_ref[...]                                  # [TB, 8]  f32
    tb = data.shape[0]

    # fc1 pre-activation accumulator, initialized with the (hoisted) b1 broadcast.
    acc = jnp.broadcast_to(b1_ref[...], (tb, HID2)).astype(jnp.float32)

    # Per-feature Linear(1, 64) + ReLU, folded directly into the fc1 contraction:
    # acc += relu(col * wf[f] + bf[f]) @ w1[f*64:(f+1)*64, :]   (no [TB,384] concat)
    for f in range(NUM_FEAT):                             # static unroll (6 features)
        col = data[:, f:f + 1]                            # [TB, 1]
        wf_row = wf_ref[f:f + 1, :]                       # [1, 64]
        bf_row = bf_ref[f:f + 1, :]                       # [1, 64]
        hf = jnp.maximum(col * wf_row + bf_row, 0.0)      # [TB, 64]  (VPU, f32)
        w1_blk = w1_ref[f * HID_FEAT:(f + 1) * HID_FEAT, :]   # [64, 64]  bf16
        acc = acc + jnp.dot(hf.astype(jnp.bfloat16), w1_blk,
                            preferred_element_type=jnp.float32)

    x = jnp.maximum(acc, 0.0)                             # ReLU after fc1, [TB, 64]

    # fc2: [TB,64] @ [64,OUT_PAD] + b2  (lane-dense 128-wide padded output)
    out_ref[...] = (jnp.dot(x.astype(jnp.bfloat16), w2_ref[...],
                            preferred_element_type=jnp.float32)
                    + b2_ref[...])


@functools.partial(jax.jit, static_argnames=("block_b",))
def mlp6_forward(data, w_feat, b_feat, w1, b1, w2, b2, *, block_b=1024):
    B = data.shape[0]
    out_dim = w2.shape[1]

    # --- layout preparation: lane-dense output, padded batch / feature axis ---
    out_pad = _round_up(max(out_dim, LANE), LANE)
    tb = min(block_b, _round_up(B, 8))
    b_pad = _round_up(B, tb)

    data_p = jnp.zeros((b_pad, FEAT_PAD), jnp.float32)
    data_p = data_p.at[:B, :NUM_FEAT].set(data.astype(jnp.float32))

    w2_p = jnp.zeros((HID2, out_pad), jnp.float32).at[:, :out_dim].set(w2)
    b2_p = jnp.zeros((1, out_pad), jnp.float32).at[:, :out_dim].set(b2)

    # MXU operands in bf16 (f32 accumulation inside the kernel).
    w1_bf = w1.astype(jnp.bfloat16)
    w2_bf = w2_p.astype(jnp.bfloat16)

    const = lambda i: (0, 0)

    flops = 2 * b_pad * (NUM_FEAT * HID_FEAT + HID_CAT * HID2 + HID2 * out_pad)
    bytes_accessed = (data_p.size * 4 + b_pad * out_pad * 4
                      + w_feat.size * 4 + b_feat.size * 4
                      + w1_bf.size * 2 + b1.size * 4
                      + w2_bf.size * 2 + b2_p.size * 4)

    out_p = pl.pallas_call(
        mlp6_kernel,
        out_shape=jax.ShapeDtypeStruct((b_pad, out_pad), jnp.float32),
        grid_spec=pltpu.PrefetchScalarGridSpec(
            num_scalar_prefetch=0,
            grid=(b_pad // tb,),
            in_specs=[
                pl.BlockSpec((tb, FEAT_PAD), lambda i: (i, 0)),      # data tile
                pl.BlockSpec((NUM_FEAT, HID_FEAT), const),           # w_feat (resident)
                pl.BlockSpec((NUM_FEAT, HID_FEAT), const),           # b_feat
                pl.BlockSpec((HID_CAT, HID2), const),                # w1 (bf16)
                pl.BlockSpec((1, HID2), const),                      # b1
                pl.BlockSpec((HID2, out_pad), const),                # w2 (bf16, padded)
                pl.BlockSpec((1, out_pad), const),                   # b2 (padded)
            ],
            out_specs=pl.BlockSpec((tb, out_pad), lambda i: (i, 0)),
        ),
        compiler_params=pltpu.CompilerParams(
            dimension_semantics=("parallel",)),
        cost_estimate=pl.CostEstimate(flops=flops, transcendentals=0,
                                      bytes_accessed=bytes_accessed),
    )(data_p, w_feat, b_feat, w1_bf, b1, w2_bf, b2_p)

    return out_p[:B, :out_dim]


def init_params(key, out_dim):
    """Deterministic param init (PyTorch-style uniform fan-in bounds)."""
    ks = jax.random.split(key, 8)

    def uni(k, shape, fan_in):
        bound = 1.0 / (fan_in ** 0.5)
        return jax.random.uniform(k, shape, jnp.float32, -bound, bound)

    w_feat = uni(ks[0], (NUM_FEAT, HID_FEAT), 1)          # six Linear(1, 64)
    b_feat = uni(ks[1], (NUM_FEAT, HID_FEAT), 1)
    w1 = uni(ks[2], (HID_CAT, HID2), HID_CAT)             # fc1.weight.T
    b1 = uni(ks[3], (1, HID2), HID_CAT)
    w2 = uni(ks[4], (HID2, out_dim), HID2)                # fc2.weight.T
    b2 = uni(ks[5], (1, out_dim), HID2)
    return w_feat, b_feat, w1, b1, w2, b2


def reference_forward_f32(data, w_feat, b_feat, w1, b1, w2, b2):
    """Pure-JAX f32 reference mirroring the PyTorch forward."""
    blocks = [
        jnp.maximum(data[:, f:f + 1] * w_feat[f][None, :] + b_feat[f][None, :], 0.0)
        for f in range(NUM_FEAT)
    ]
    h = jnp.concatenate(blocks, axis=1)
    x = jnp.maximum(h @ w1 + b1, 0.0)
    return x @ w2 + b2


def reference_forward_bf16mm(data, w_feat, b_feat, w1, b1, w2, b2):
    """Reference with the same bf16-at-the-MXU / f32-accumulate numerics as the kernel."""
    blocks = [
        jnp.maximum(data[:, f:f + 1] * w_feat[f][None, :] + b_feat[f][None, :], 0.0)
        for f in range(NUM_FEAT)
    ]
    h = jnp.concatenate(blocks, axis=1)
    pre = jnp.dot(h.astype(jnp.bfloat16), w1.astype(jnp.bfloat16),
                  preferred_element_type=jnp.float32) + b1
    x = jnp.maximum(pre, 0.0)
    return jnp.dot(x.astype(jnp.bfloat16), w2.astype(jnp.bfloat16),
                   preferred_element_type=jnp.float32) + b2


if __name__ == "__main__":
    key = jax.random.PRNGKey(0)
    k_data, k_param, k_data2 = jax.random.split(key, 3)

    OUT_DIM = 4
    params = init_params(k_param, OUT_DIM)

    # --- small case: single grid step ---
    B = 8
    data = jax.random.normal(k_data, (B, NUM_FEAT), dtype=jnp.float32)
    out = jax.block_until_ready(mlp6_forward(data, *params))
    assert out.shape == (B, OUT_DIM)
    ref_bf = reference_forward_bf16mm(data, *params)
    ref_f32 = reference_forward_f32(data, *params)
    assert jnp.allclose(out, ref_bf, atol=1e-4, rtol=1e-4), "bf16-matched ref mismatch"
    assert jnp.allclose(out, ref_f32, atol=5e-2, rtol=5e-2), "f32 ref mismatch"

    # --- ragged batch + multi-step grid (exercises padding and pipelining) ---
    B2 = 200
    data2 = jax.random.normal(k_data2, (B2, NUM_FEAT), dtype=jnp.float32)
    out2 = jax.block_until_ready(mlp6_forward(data2, *params, block_b=64))
    assert out2.shape == (B2, OUT_DIM)
    ref2_bf = reference_forward_bf16mm(data2, *params)
    ref2_f32 = reference_forward_f32(data2, *params)
    assert jnp.allclose(out2, ref2_bf, atol=1e-4, rtol=1e-4), "bf16-matched ref mismatch (B2)"
    assert jnp.allclose(out2, ref2_f32, atol=5e-2, rtol=5e-2), "f32 ref mismatch (B2)"

    print("KERNEL_OK")
</pallas_src>

<mosaic_0001>
module attributes {stable_mosaic.version = 11 : i64} {
  func.func @mlp6_kernel(%arg0: i32, %arg1: memref<8x8xf32, #tpu.memory_space<vmem>>, %arg2: memref<6x64xf32, #tpu.memory_space<vmem>>, %arg3: memref<6x64xf32, #tpu.memory_space<vmem>>, %arg4: memref<384x64xbf16, #tpu.memory_space<vmem>>, %arg5: memref<1x64xf32, #tpu.memory_space<vmem>>, %arg6: memref<64x128xbf16, #tpu.memory_space<vmem>>, %arg7: memref<1x128xf32, #tpu.memory_space<vmem>>, %arg8: memref<8x128xf32, #tpu.memory_space<vmem>>) attributes {dimension_semantics = [#tpu.dimension_semantics<parallel>], iteration_bounds = array<i64: 1>, scalar_prefetch = 0 : i64, scratch_operands = 0 : i64, tpu.core_type = #tpu.core_type<tc>, window_params = [{transform_indices = @transform_0, window_bounds = array<i64: 8, 8>}, {pipeline_mode = #tpu.pipeline_mode<synchronous>, transform_indices = @transform_1, window_bounds = array<i64: 6, 64>}, {pipeline_mode = #tpu.pipeline_mode<synchronous>, transform_indices = @transform_2, window_bounds = array<i64: 6, 64>}, {pipeline_mode = #tpu.pipeline_mode<synchronous>, transform_indices = @transform_3, window_bounds = array<i64: 384, 64>}, {pipeline_mode = #tpu.pipeline_mode<synchronous>, transform_indices = @transform_4, window_bounds = array<i64: 1, 64>}, {pipeline_mode = #tpu.pipeline_mode<synchronous>, transform_indices = @transform_5, window_bounds = array<i64: 64, 128>}, {pipeline_mode = #tpu.pipeline_mode<synchronous>, transform_indices = @transform_6, window_bounds = array<i64: 1, 128>}, {transform_indices = @transform_7, window_bounds = array<i64: 8, 128>}]} {
    %c0 = arith.constant 0 : index
    %c0_0 = arith.constant 0 : index
    %0 = vector.load %arg1[%c0, %c0_0] : memref<8x8xf32, #tpu.memory_space<vmem>>, vector<8x8xf32>
    %c0_1 = arith.constant 0 : index
    %c0_2 = arith.constant 0 : index
    %1 = vector.load %arg5[%c0_1, %c0_2] : memref<1x64xf32, #tpu.memory_space<vmem>>, vector<1x64xf32>
    %2 = vector.shape_cast %1 : vector<1x64xf32> to vector<1x64xf32>
    %3 = vector.broadcast %2 : vector<1x64xf32> to vector<8x64xf32>
    %4 = vector.extract_strided_slice %0 {offsets = [0, 0], sizes = [8, 1], strides = [1, 1]} : vector<8x8xf32> to vector<8x1xf32>
    %c0_3 = arith.constant 0 : index
    %c0_4 = arith.constant 0 : index
    %5 = vector.load %arg2[%c0_3, %c0_4] : memref<6x64xf32, #tpu.memory_space<vmem>>, vector<1x64xf32>
    %c0_5 = arith.constant 0 : index
    %c0_6 = arith.constant 0 : index
    %6 = vector.load %arg3[%c0_5, %c0_6] : memref<6x64xf32, #tpu.memory_space<vmem>>, vector<1x64xf32>
    %7 = vector.broadcast %4 : vector<8x1xf32> to vector<8x64xf32>
    %8 = vector.broadcast %5 : vector<1x64xf32> to vector<8x64xf32>
    %9 = arith.mulf %7, %8 : vector<8x64xf32>
    %10 = vector.broadcast %6 : vector<1x64xf32> to vector<8x64xf32>
    %11 = arith.addf %9, %10 : vector<8x64xf32>
    %cst = arith.constant 0.000000e+00 : f32
    %12 = vector.broadcast %cst : f32 to vector<8x64xf32>
    %13 = arith.maximumf %11, %12 : vector<8x64xf32>
    %c0_7 = arith.constant 0 : index
    %c0_8 = arith.constant 0 : index
    %14 = vector.load %arg4[%c0_7, %c0_8] : memref<384x64xbf16, #tpu.memory_space<vmem>>, vector<64x64xbf16>
    %15 = arith.truncf %13 : vector<8x64xf32> to vector<8x64xbf16>
    %cst_9 = arith.constant dense<0.000000e+00> : vector<8x64xf32>
    %16 = tpu.matmul %15, %14, %cst_9 {dimension_numbers = #tpu.dot_dimension_numbers<[1], [0], [0], [1], [0, 0, 1, 1], [], []>} : vector<8x64xbf16>, vector<64x64xbf16>, vector<8x64xf32> -> vector<8x64xf32>
    %17 = arith.addf %3, %16 : vector<8x64xf32>
    %18 = vector.extract_strided_slice %0 {offsets = [0, 1], sizes = [8, 1], strides = [1, 1]} : vector<8x8xf32> to vector<8x1xf32>
    %c1 = arith.constant 1 : index
    %c0_10 = arith.constant 0 : index
    %19 = vector.load %arg2[%c1, %c0_10] : memref<6x64xf32, #tpu.memory_space<vmem>>, vector<1x64xf32>
    %c1_11 = arith.constant 1 : index
    %c0_12 = arith.constant 0 : index
    %20 = vector.load %arg3[%c1_11, %c0_12] : memref<6x64xf32, #tpu.memory_space<vmem>>, vector<1x64xf32>
    %21 = vector.broadcast %18 : vector<8x1xf32> to vector<8x64xf32>
    %22 = vector.broadcast %19 : vector<1x64xf32> to vector<8x64xf32>
    %23 = arith.mulf %21, %22 : vector<8x64xf32>
    %24 = vector.broadcast %20 : vector<1x64xf32> to vector<8x64xf32>
    %25 = arith.addf %23, %24 : vector<8x64xf32>
    %cst_13 = arith.constant 0.000000e+00 : f32
    %26 = vector.broadcast %cst_13 : f32 to vector<8x64xf32>
    %27 = arith.maximumf %25, %26 : vector<8x64xf32>
    %c64 = arith.constant 64 : index
    %c0_14 = arith.constant 0 : index
    %28 = vector.load %arg4[%c64, %c0_14] : memref<384x64xbf16, #tpu.memory_space<vmem>>, vector<64x64xbf16>
    %29 = arith.truncf %27 : vector<8x64xf32> to vector<8x64xbf16>
    %cst_15 = arith.constant dense<0.000000e+00> : vector<8x64xf32>
    %30 = tpu.matmul %29, %28, %cst_15 {dimension_numbers = #tpu.dot_dimension_numbers<[1], [0], [0], [1], [0, 0, 1, 1], [], []>} : vector<8x64xbf16>, vector<64x64xbf16>, vector<8x64xf32> -> vector<8x64xf32>
    %31 = arith.addf %17, %30 : vector<8x64xf32>
    %32 = vector.extract_strided_slice %0 {offsets = [0, 2], sizes = [8, 1], strides = [1, 1]} : vector<8x8xf32> to vector<8x1xf32>
    %c2 = arith.constant 2 : index
    %c0_16 = arith.constant 0 : index
    %33 = vector.load %arg2[%c2, %c0_16] : memref<6x64xf32, #tpu.memory_space<vmem>>, vector<1x64xf32>
    %c2_17 = arith.constant 2 : index
    %c0_18 = arith.constant 0 : index
    %34 = vector.load %arg3[%c2_17, %c0_18] : memref<6x64xf32, #tpu.memory_space<vmem>>, vector<1x64xf32>
    %35 = vector.broadcast %32 : vector<8x1xf32> to vector<8x64xf32>
    %36 = vector.broadcast %33 : vector<1x64xf32> to vector<8x64xf32>
    %37 = arith.mulf %35, %36 : vector<8x64xf32>
    %38 = vector.broadcast %34 : vector<1x64xf32> to vector<8x64xf32>
    %39 = arith.addf %37, %38 : vector<8x64xf32>
    %cst_19 = arith.constant 0.000000e+00 : f32
    %40 = vector.broadcast %cst_19 : f32 to vector<8x64xf32>
    %41 = arith.maximumf %39, %40 : vector<8x64xf32>
    %c128 = arith.constant 128 : index
    %c0_20 = arith.constant 0 : index
    %42 = vector.load %arg4[%c128, %c0_20] : memref<384x64xbf16, #tpu.memory_space<vmem>>, vector<64x64xbf16>
    %43 = arith.truncf %41 : vector<8x64xf32> to vector<8x64xbf16>
    %cst_21 = arith.constant dense<0.000000e+00> : vector<8x64xf32>
    %44 = tpu.matmul %43, %42, %cst_21 {dimension_numbers = #tpu.dot_dimension_numbers<[1], [0], [0], [1], [0, 0, 1, 1], [], []>} : vector<8x64xbf16>, vector<64x64xbf16>, vector<8x64xf32> -> vector<8x64xf32>
    %45 = arith.addf %31, %44 : vector<8x64xf32>
    %46 = vector.extract_strided_slice %0 {offsets = [0, 3], sizes = [8, 1], strides = [1, 1]} : vector<8x8xf32> to vector<8x1xf32>
    %c3 = arith.constant 3 : index
    %c0_22 = arith.constant 0 : index
    %47 = vector.load %arg2[%c3, %c0_22] : memref<6x64xf32, #tpu.memory_space<vmem>>, vector<1x64xf32>
    %c3_23 = arith.constant 3 : index
    %c0_24 = arith.constant 0 : index
    %48 = vector.load %arg3[%c3_23, %c0_24] : memref<6x64xf32, #tpu.memory_space<vmem>>, vector<1x64xf32>
    %49 = vector.broadcast %46 : vector<8x1xf32> to vector<8x64xf32>
    %50 = vector.broadcast %47 : vector<1x64xf32> to vector<8x64xf32>
    %51 = arith.mulf %49, %50 : vector<8x64xf32>
    %52 = vector.broadcast %48 : vector<1x64xf32> to vector<8x64xf32>
    %53 = arith.addf %51, %52 : vector<8x64xf32>
    %cst_25 = arith.constant 0.000000e+00 : f32
    %54 = vector.broadcast %cst_25 : f32 to vector<8x64xf32>
    %55 = arith.maximumf %53, %54 : vector<8x64xf32>
    %c192 = arith.constant 192 : index
    %c0_26 = arith.constant 0 : index
    %56 = vector.load %arg4[%c192, %c0_26] : memref<384x64xbf16, #tpu.memory_space<vmem>>, vector<64x64xbf16>
    %57 = arith.truncf %55 : vector<8x64xf32> to vector<8x64xbf16>
    %cst_27 = arith.constant dense<0.000000e+00> : vector<8x64xf32>
    %58 = tpu.matmul %57, %56, %cst_27 {dimension_numbers = #tpu.dot_dimension_numbers<[1], [0], [0], [1], [0, 0, 1, 1], [], []>} : vector<8x64xbf16>, vector<64x64xbf16>, vector<8x64xf32> -> vector<8x64xf32>
    %59 = arith.addf %45, %58 : vector<8x64xf32>
    %60 = vector.extract_strided_slice %0 {offsets = [0, 4], sizes = [8, 1], strides = [1, 1]} : vector<8x8xf32> to vector<8x1xf32>
    %c4 = arith.constant 4 : index
    %c0_28 = arith.constant 0 : index
    %61 = vector.load %arg2[%c4, %c0_28] : memref<6x64xf32, #tpu.memory_space<vmem>>, vector<1x64xf32>
    %c4_29 = arith.constant 4 : index
    %c0_30 = arith.constant 0 : index
    %62 = vector.load %arg3[%c4_29, %c0_30] : memref<6x64xf32, #tpu.memory_space<vmem>>, vector<1x64xf32>
    %63 = vector.broadcast %60 : vector<8x1xf32> to vector<8x64xf32>
    %64 = vector.broadcast %61 : vector<1x64xf32> to vector<8x64xf32>
    %65 = arith.mulf %63, %64 : vector<8x64xf32>
    %66 = vector.broadcast %62 : vector<1x64xf32> to vector<8x64xf32>
    %67 = arith.addf %65, %66 : vector<8x64xf32>
    %cst_31 = arith.constant 0.000000e+00 : f32
    %68 = vector.broadcast %cst_31 : f32 to vector<8x64xf32>
    %69 = arith.maximumf %67, %68 : vector<8x64xf32>
    %c256 = arith.constant 256 : index
    %c0_32 = arith.constant 0 : index
    %70 = vector.load %arg4[%c256, %c0_32] : memref<384x64xbf16, #tpu.memory_space<vmem>>, vector<64x64xbf16>
    %71 = arith.truncf %69 : vector<8x64xf32> to vector<8x64xbf16>
    %cst_33 = arith.constant dense<0.000000e+00> : vector<8x64xf32>
    %72 = tpu.matmul %71, %70, %cst_33 {dimension_numbers = #tpu.dot_dimension_numbers<[1], [0], [0], [1], [0, 0, 1, 1], [], []>} : vector<8x64xbf16>, vector<64x64xbf16>, vector<8x64xf32> -> vector<8x64xf32>
    %73 = arith.addf %59, %72 : vector<8x64xf32>
    %74 = vector.extract_strided_slice %0 {offsets = [0, 5], sizes = [8, 1], strides = [1, 1]} : vector<8x8xf32> to vector<8x1xf32>
    %c5 = arith.constant 5 : index
    %c0_34 = arith.constant 0 : index
    %75 = vector.load %arg2[%c5, %c0_34] : memref<6x64xf32, #tpu.memory_space<vmem>>, vector<1x64xf32>
    %c5_35 = arith.constant 5 : index
    %c0_36 = arith.constant 0 : index
    %76 = vector.load %arg3[%c5_35, %c0_36] : memref<6x64xf32, #tpu.memory_space<vmem>>, vector<1x64xf32>
    %77 = vector.broadcast %74 : vector<8x1xf32> to vector<8x64xf32>
    %78 = vector.broadcast %75 : vector<1x64xf32> to vector<8x64xf32>
    %79 = arith.mulf %77, %78 : vector<8x64xf32>
    %80 = vector.broadcast %76 : vector<1x64xf32> to vector<8x64xf32>
    %81 = arith.addf %79, %80 : vector<8x64xf32>
    %cst_37 = arith.constant 0.000000e+00 : f32
    %82 = vector.broadcast %cst_37 : f32 to vector<8x64xf32>
    %83 = arith.maximumf %81, %82 : vector<8x64xf32>
    %c320 = arith.constant 320 : index
    %c0_38 = arith.constant 0 : index
    %84 = vector.load %arg4[%c320, %c0_38] : memref<384x64xbf16, #tpu.memory_space<vmem>>, vector<64x64xbf16>
    %85 = arith.truncf %83 : vector<8x64xf32> to vector<8x64xbf16>
    %cst_39 = arith.constant dense<0.000000e+00> : vector<8x64xf32>
    %86 = tpu.matmul %85, %84, %cst_39 {dimension_numbers = #tpu.dot_dimension_numbers<[1], [0], [0], [1], [0, 0, 1, 1], [], []>} : vector<8x64xbf16>, vector<64x64xbf16>, vector<8x64xf32> -> vector<8x64xf32>
    %87 = arith.addf %73, %86 : vector<8x64xf32>
    %cst_40 = arith.constant 0.000000e+00 : f32
    %88 = vector.broadcast %cst_40 : f32 to vector<8x64xf32>
    %89 = arith.maximumf %87, %88 : vector<8x64xf32>
    %90 = arith.truncf %89 : vector<8x64xf32> to vector<8x64xbf16>
    %c0_41 = arith.constant 0 : index
    %c0_42 = arith.constant 0 : index
    %91 = vector.load %arg6[%c0_41, %c0_42] : memref<64x128xbf16, #tpu.memory_space<vmem>>, vector<64x128xbf16>
    %cst_43 = arith.constant dense<0.000000e+00> : vector<8x128xf32>
    %92 = tpu.matmul %90, %91, %cst_43 {dimension_numbers = #tpu.dot_dimension_numbers<[1], [0], [0], [1], [0, 0, 1, 1], [], []>} : vector<8x64xbf16>, vector<64x128xbf16>, vector<8x128xf32> -> vector<8x128xf32>
    %c0_44 = arith.constant 0 : index
    %c0_45 = arith.constant 0 : index
    %93 = vector.load %arg7[%c0_44, %c0_45] : memref<1x128xf32, #tpu.memory_space<vmem>>, vector<1x128xf32>
    %94 = vector.broadcast %93 : vector<1x128xf32> to vector<8x128xf32>
    %95 = arith.addf %92, %94 : vector<8x128xf32>
    %c0_46 = arith.constant 0 : index
    %c0_47 = arith.constant 0 : index
    %96 = vector.load %arg8[%c0_46, %c0_47] : memref<8x128xf32, #tpu.memory_space<vmem>>, vector<8x128xf32>
    tpu.vector_store %arg8[%c0_46, %c0_47], %95 {strides = array<i32>} : memref<8x128xf32, #tpu.memory_space<vmem>>, vector<8x128xf32>,
    return
  }
  func.func @transform_0(%arg0: i32) -> (i32, i32) {
    %c0_i32 = arith.constant 0 : i32
    %c0_i32_0 = arith.constant 0 : i32
    return %arg0, %c0_i32 : i32, i32
  }
  func.func @transform_1(%arg0: i32) -> (i32, i32) {
    %c0_i32 = arith.constant 0 : i32
    %c0_i32_0 = arith.constant 0 : i32
    %c0_i32_1 = arith.constant 0 : i32
    return %c0_i32, %c0_i32_0 : i32, i32
  }
  func.func @transform_2(%arg0: i32) -> (i32, i32) {
    %c0_i32 = arith.constant 0 : i32
    %c0_i32_0 = arith.constant 0 : i32
    %c0_i32_1 = arith.constant 0 : i32
    return %c0_i32, %c0_i32_0 : i32, i32
  }
  func.func @transform_3(%arg0: i32) -> (i32, i32) {
    %c0_i32 = arith.constant 0 : i32
    %c0_i32_0 = arith.constant 0 : i32
    %c0_i32_1 = arith.constant 0 : i32
    return %c0_i32, %c0_i32_0 : i32, i32
  }
  func.func @transform_4(%arg0: i32) -> (i32, i32) {
    %c0_i32 = arith.constant 0 : i32
    %c0_i32_0 = arith.constant 0 : i32
    %c0_i32_1 = arith.constant 0 : i32
    return %c0_i32, %c0_i32_0 : i32, i32
  }
  func.func @transform_5(%arg0: i32) -> (i32, i32) {
    %c0_i32 = arith.constant 0 : i32
    %c0_i32_0 = arith.constant 0 : i32
    %c0_i32_1 = arith.constant 0 : i32
    return %c0_i32, %c0_i32_0 : i32, i32
  }
  func.func @transform_6(%arg0: i32) -> (i32, i32) {
    %c0_i32 = arith.constant 0 : i32
    %c0_i32_0 = arith.constant 0 : i32
    %c0_i32_1 = arith.constant 0 : i32
    return %c0_i32, %c0_i32_0 : i32, i32
  }
  func.func @transform_7(%arg0: i32) -> (i32, i32) {
    %c0_i32 = arith.constant 0 : i32
    %c0_i32_0 = arith.constant 0 : i32
    return %arg0, %c0_i32 : i32, i32
  }
}

</mosaic_0001>

<llo_original>
// kernel: mlp6_forward.1
$region0: #{mlp6_forward.1}
  #allocation0 [shape = 'u32[]', space=smem, size = 0x4, offset = 0x4, fixed_abs, tag = 'smem constant byte address 0x4 - core index']
  #allocation1 [shape = 'u32[72,128]{1,0:T(1,128)}', space=vmem, size = 0x9000, scoped, tag = 'internal scratch']
  %s0 = inlined_call_operand.vmem [shape: f32[8,8], index: 0, kind: input, shape index: {}]
  %s1 = inlined_call_operand.vmem [shape: f32[6,64], index: 1, kind: input, shape index: {}]
  %s2 = inlined_call_operand.vmem [shape: f32[6,64], index: 2, kind: input, shape index: {}]
  %s3 = inlined_call_operand.vmem [shape: bf16[384,64], index: 3, kind: input, shape index: {}]
  %s4 = inlined_call_operand.vmem [shape: f32[1,64], index: 4, kind: input, shape index: {}]
  %s5 = inlined_call_operand.vmem [shape: bf16[64,128], index: 5, kind: input, shape index: {}]
  %s6 = inlined_call_operand.vmem [shape: f32[1,128], index: 6, kind: input, shape index: {}]
  %s7 = inlined_call_operand.vmem [shape: f32[8,128], index: 7, kind: output, shape index: {}]
  %s8 = sld [smem:[#allocation0]]
  $region38: #{mlp6_forward.1} parent=0
    _
  %s10 = ssub.s32 1, %s8
  %s11 = scalar_select 0, %s10, %s8
  // Predicated region
  $region2: #{mlp6_forward.1} parent=0 // pred_check
    _
  $region3: #{mlp6_forward.1} parent=0 // pred_check_branch
    %13 = sbr.rel (0) target = $region5
  $region4: #{mlp6_forward.1} parent=0 // pred_region
    _
  $region5: #{mlp6_forward.1} parent=0 // pred_fallthru
    _
  // Predicated region
  $region6: #{mlp6_forward.1} parent=0 // pred_check
    _
  $region7: #{mlp6_forward.1} parent=0 // pred_check_branch
    %15 = sbr.rel (0) target = $region9
  $region8: #{mlp6_forward.1} parent=0 // pred_region
    _
  $region9: #{mlp6_forward.1} parent=0 // pred_fallthru
    _
  // Predicated region
  $region10: #{mlp6_forward.1} parent=0 // pred_check
    _
  $region11: #{mlp6_forward.1} parent=0 // pred_check_branch
    %17 = sbr.rel (0) target = $region13
  $region12: #{mlp6_forward.1} parent=0 // pred_region
    _
  $region13: #{mlp6_forward.1} parent=0 // pred_fallthru
    _
  // Predicated region
  $region14: #{mlp6_forward.1} parent=0 // pred_check
    _
  $region15: #{mlp6_forward.1} parent=0 // pred_check_branch
    %19 = sbr.rel (0) target = $region17
  $region16: #{mlp6_forward.1} parent=0 // pred_region
    _
  $region17: #{mlp6_forward.1} parent=0 // pred_fallthru
    _
  // Predicated region
  $region18: #{mlp6_forward.1} parent=0 // pred_check
    _
  $region19: #{mlp6_forward.1} parent=0 // pred_check_branch
    %21 = sbr.rel (0) target = $region21
  $region20: #{mlp6_forward.1} parent=0 // pred_region
    _
  $region21: #{mlp6_forward.1} parent=0 // pred_fallthru
    _
  // Predicated region
  $region22: #{mlp6_forward.1} parent=0 // pred_check
    _
  $region23: #{mlp6_forward.1} parent=0 // pred_check_branch
    %23 = sbr.rel (0) target = $region25
  $region24: #{mlp6_forward.1} parent=0 // pred_region
    _
  $region25: #{mlp6_forward.1} parent=0 // pred_fallthru
    _
  // Predicated region
  $region26: #{mlp6_forward.1} parent=0 // pred_check
    _
  $region27: #{mlp6_forward.1} parent=0 // pred_check_branch
    %25 = sbr.rel (0) target = $region29
  $region28: #{mlp6_forward.1} parent=0 // pred_region
    _
  $region29: #{mlp6_forward.1} parent=0 // pred_fallthru
    _
  %v27 = vld [vmem:[%s0] sm:$0xff]
  %v28 = vld [vmem:[%s4] sm:$0x1]
  %v30 = vperm.slane %v28, 0
  %v32 = vld [vmem:[%s1] sm:$0x1]
  %v33 = vld [vmem:[%s2] sm:$0x1]
  %35 = vset.pattern.permute.xlu0 0
  %36 = vperm.xlu0 %35, %v27
  %v37 = vpop.permute.xlu0 %36
  %v39 = vperm.slane %v32, 0
  %v40 = vmul.f32 %v37, %v39
  %v41 = vperm.slane %v33, 0
  %v42 = vadd.f32 %v40, %v41
  %v43 = vmax.f32 %v42, 0.0
  %v44 = vld [vmem:[%s3] sm:$0xf]
  %v45 = vld [vmem:[%s3 + $0x4] sm:$0xf]
  %v46 = vld [vmem:[%s3 + $0x8] sm:$0xf]
  %v47 = vld [vmem:[%s3 + $0xc] sm:$0xf]
  %v48 = vld [vmem:[%s3 + $0x10] sm:$0xf]
  %v49 = vld [vmem:[%s3 + $0x14] sm:$0xf]
  %v50 = vld [vmem:[%s3 + $0x18] sm:$0xf]
  %v51 = vld [vmem:[%s3 + $0x1c] sm:$0xf]
  %v52 = vpack.c.bf16 %v43, %v43
  %v61 = vunpack.c.l.b16 %v44
  %v62 = vunpack.c.l.b16 %v45
  %v63 = vunpack.c.l.b16 %v46
  %v64 = vunpack.c.l.b16 %v47
  %v65 = vunpack.c.l.b16 %v48
  %v66 = vunpack.c.l.b16 %v49
  %v67 = vunpack.c.l.b16 %v50
  %v68 = vunpack.c.l.b16 %v51
  %v69 = vpack.c.b16 %v62, %v61
  %v70 = vpack.c.b16 %v64, %v63
  %v71 = vpack.c.b16 %v66, %v65
  %v72 = vpack.c.b16 %v68, %v67
  %vm77 = vcmask 523264
  %v79 = vsel %vm77, %v52, 0
  %81 = vmatpush.bf16.msra.mxu0 0
  %82 = vmatpush.bf16.msra.mxu0 0
  %83 = vmatpush.bf16.msra.mxu0 0
  %84 = vmatpush.bf16.msra.mxu0 0
  %85 = vmatpush.bf16.msra.mxu0 %v72
  %86 = vmatpush.bf16.msra.mxu0 %v71
  %87 = vmatpush.bf16.msra.mxu0 %v70
  %88 = vmatpush.bf16.msra.mxu0 %v69
  %89 = vmatmul.bf16.gmra.mxu0 %v79
  %v90 = vpop.f32.mrf.mxu0
  %v91 = vadd.f32 0.0, %v90
  %v92 = vpop.f32.mrf.mxu0
  %93 = vdwg.mxu0
  %v94 = vadd.f32 %v30, %v91
  %v95 = vld [vmem:[%s1 + $0x1] sm:$0x1]
  %v96 = vld [vmem:[%s2 + $0x1] sm:$0x1]
  %97 = vset.pattern.permute.xlu0 1
  %98 = vperm.xlu0 %97, %v27
  %v99 = vpop.permute.xlu0 %98
  %v101 = vperm.slane %v95, 0
  %v102 = vmul.f32 %v99, %v101
  %v103 = vperm.slane %v96, 0
  %v104 = vadd.f32 %v102, %v103
  %v105 = vmax.f32 %v104, 0.0
  %v106 = vld [vmem:[%s3 + $0x20] sm:$0xf]
  %v107 = vld [vmem:[%s3 + $0x24] sm:$0xf]
  %v108 = vld [vmem:[%s3 + $0x28] sm:$0xf]
  %v109 = vld [vmem:[%s3 + $0x2c] sm:$0xf]
  %v110 = vld [vmem:[%s3 + $0x30] sm:$0xf]
  %v111 = vld [vmem:[%s3 + $0x34] sm:$0xf]
  %v112 = vld [vmem:[%s3 + $0x38] sm:$0xf]
  %v113 = vld [vmem:[%s3 + $0x3c] sm:$0xf]
  %v114 = vpack.c.bf16 %v105, %v105
  %v123 = vunpack.c.l.b16 %v106
  %v124 = vunpack.c.l.b16 %v107
  %v125 = vunpack.c.l.b16 %v108
  %v126 = vunpack.c.l.b16 %v109
  %v127 = vunpack.c.l.b16 %v110
  %v128 = vunpack.c.l.b16 %v111
  %v129 = vunpack.c.l.b16 %v112
  %v130 = vunpack.c.l.b16 %v113
  %v131 = vpack.c.b16 %v124, %v123
  %v132 = vpack.c.b16 %v126, %v125
  %v133 = vpack.c.b16 %v128, %v127
  %v134 = vpack.c.b16 %v130, %v129
  %v140 = vsel %vm77, %v114, 0
  %142 = vmatpush.bf16.msra.mxu0 0
  %143 = vmatpush.bf16.msra.mxu0 0
  %144 = vmatpush.bf16.msra.mxu0 0
  %145 = vmatpush.bf16.msra.mxu0 0
  %146 = vmatpush.bf16.msra.mxu0 %v134
  %147 = vmatpush.bf16.msra.mxu0 %v133
  %148 = vmatpush.bf16.msra.mxu0 %v132
  %149 = vmatpush.bf16.msra.mxu0 %v131
  %150 = vmatmul.bf16.gmra.mxu0 %v140
  %v151 = vpop.f32.mrf.mxu0
  %v152 = vadd.f32 0.0, %v151
  %v153 = vpop.f32.mrf.mxu0
  %154 = vdwg.mxu0
  %v155 = vadd.f32 %v94, %v152
  %v156 = vld [vmem:[%s1 + $0x2] sm:$0x1]
  %v157 = vld [vmem:[%s2 + $0x2] sm:$0x1]
  %158 = vset.pattern.permute.xlu0 2
  %159 = vperm.xlu0 %158, %v27
  %v160 = vpop.permute.xlu0 %159
  %v162 = vperm.slane %v156, 0
  %v163 = vmul.f32 %v160, %v162
  %v164 = vperm.slane %v157, 0
  %v165 = vadd.f32 %v163, %v164
  %v166 = vmax.f32 %v165, 0.0
  %v167 = vld [vmem:[%s3 + $0x40] sm:$0xf]
  %v168 = vld [vmem:[%s3 + $0x44] sm:$0xf]
  %v169 = vld [vmem:[%s3 + $0x48] sm:$0xf]
  %v170 = vld [vmem:[%s3 + $0x4c] sm:$0xf]
  %v171 = vld [vmem:[%s3 + $0x50] sm:$0xf]
  %v172 = vld [vmem:[%s3 + $0x54] sm:$0xf]
  %v173 = vld [vmem:[%s3 + $0x58] sm:$0xf]
  %v174 = vld [vmem:[%s3 + $0x5c] sm:$0xf]
  %v175 = vpack.c.bf16 %v166, %v166
  %v184 = vunpack.c.l.b16 %v167
  %v185 = vunpack.c.l.b16 %v168
  %v186 = vunpack.c.l.b16 %v169
  %v187 = vunpack.c.l.b16 %v170
  %v188 = vunpack.c.l.b16 %v171
  %v189 = vunpack.c.l.b16 %v172
  %v190 = vunpack.c.l.b16 %v173
  %v191 = vunpack.c.l.b16 %v174
  %v192 = vpack.c.b16 %v185, %v184
  %v193 = vpack.c.b16 %v187, %v186
  %v194 = vpack.c.b16 %v189, %v188
  %v195 = vpack.c.b16 %v191, %v190
  %v201 = vsel %vm77, %v175, 0
  %203 = vmatpush.bf16.msra.mxu0 0
  %204 = vmatpush.bf16.msra.mxu0 0
  %205 = vmatpush.bf16.msra.mxu0 0
  %206 = vmatpush.bf16.msra.mxu0 0
  %207 = vmatpush.bf16.msra.mxu0 %v195
  %208 = vmatpush.bf16.msra.mxu0 %v194
  %209 = vmatpush.bf16.msra.mxu0 %v193
  %210 = vmatpush.bf16.msra.mxu0 %v192
  %211 = vmatmul.bf16.gmra.mxu0 %v201
  %v212 = vpop.f32.mrf.mxu0
  %v213 = vadd.f32 0.0, %v212
  %v214 = vpop.f32.mrf.mxu0
  %215 = vdwg.mxu0
  %v216 = vadd.f32 %v155, %v213
  %v217 = vld [vmem:[%s1 + $0x3] sm:$0x1]
  %v218 = vld [vmem:[%s2 + $0x3] sm:$0x1]
  %219 = vset.pattern.permute.xlu0 3
  %220 = vperm.xlu0 %219, %v27
  %v221 = vpop.permute.xlu0 %220
  %v223 = vperm.slane %v217, 0
  %v224 = vmul.f32 %v221, %v223
  %v225 = vperm.slane %v218, 0
  %v226 = vadd.f32 %v224, %v225
  %v227 = vmax.f32 %v226, 0.0
  %v228 = vld [vmem:[%s3 + $0x60] sm:$0xf]
  %v229 = vld [vmem:[%s3 + $0x64] sm:$0xf]
  %v230 = vld [vmem:[%s3 + $0x68] sm:$0xf]
  %v231 = vld [vmem:[%s3 + $0x6c] sm:$0xf]
  %v232 = vld [vmem:[%s3 + $0x70] sm:$0xf]
  %v233 = vld [vmem:[%s3 + $0x74] sm:$0xf]
  %v234 = vld [vmem:[%s3 + $0x78] sm:$0xf]
  %v235 = vld [vmem:[%s3 + $0x7c] sm:$0xf]
  %v236 = vpack.c.bf16 %v227, %v227
  %v245 = vunpack.c.l.b16 %v228
  %v246 = vunpack.c.l.b16 %v229
  %v247 = vunpack.c.l.b16 %v230
  %v248 = vunpack.c.l.b16 %v231
  %v249 = vunpack.c.l.b16 %v232
  %v250 = vunpack.c.l.b16 %v233
  %v251 = vunpack.c.l.b16 %v234
  %v252 = vunpack.c.l.b16 %v235
  %v253 = vpack.c.b16 %v246, %v245
  %v254 = vpack.c.b16 %v248, %v247
  %v255 = vpack.c.b16 %v250, %v249
  %v256 = vpack.c.b16 %v252, %v251
  %v262 = vsel %vm77, %v236, 0
  %264 = vmatpush.bf16.msra.mxu0 0
  %265 = vmatpush.bf16.msra.mxu0 0
  %266 = vmatpush.bf16.msra.mxu0 0
  %267 = vmatpush.bf16.msra.mxu0 0
  %268 = vmatpush.bf16.msra.mxu0 %v256
  %269 = vmatpush.bf16.msra.mxu0 %v255
  %270 = vmatpush.bf16.msra.mxu0 %v254
  %271 = vmatpush.bf16.msra.mxu0 %v253
  %272 = vmatmul.bf16.gmra.mxu0 %v262
  %v273 = vpop.f32.mrf.mxu0
  %v274 = vadd.f32 0.0, %v273
  %v275 = vpop.f32.mrf.mxu0
  %276 = vdwg.mxu0
  %v277 = vadd.f32 %v216, %v274
  %v278 = vld [vmem:[%s1 + $0x4] sm:$0x1]
  %v279 = vld [vmem:[%s2 + $0x4] sm:$0x1]
  %280 = vset.pattern.permute.xlu0 4
  %281 = vperm.xlu0 %280, %v27
  %v282 = vpop.permute.xlu0 %281
  %v284 = vperm.slane %v278, 0
  %v285 = vmul.f32 %v282, %v284
  %v286 = vperm.slane %v279, 0
  %v287 = vadd.f32 %v285, %v286
  %v288 = vmax.f32 %v287, 0.0
  %v289 = vld [vmem:[%s3 + $0x80] sm:$0xf]
  %v290 = vld [vmem:[%s3 + $0x84] sm:$0xf]
  %v291 = vld [vmem:[%s3 + $0x88] sm:$0xf]
  %v292 = vld [vmem:[%s3 + $0x8c] sm:$0xf]
  %v293 = vld [vmem:[%s3 + $0x90] sm:$0xf]
  %v294 = vld [vmem:[%s3 + $0x94] sm:$0xf]
  %v295 = vld [vmem:[%s3 + $0x98] sm:$0xf]
  %v296 = vld [vmem:[%s3 + $0x9c] sm:$0xf]
  %v297 = vpack.c.bf16 %v288, %v288
  %v306 = vunpack.c.l.b16 %v289
  %v307 = vunpack.c.l.b16 %v290
  %v308 = vunpack.c.l.b16 %v291
  %v309 = vunpack.c.l.b16 %v292
  %v310 = vunpack.c.l.b16 %v293
  %v311 = vunpack.c.l.b16 %v294
  %v312 = vunpack.c.l.b16 %v295
  %v313 = vunpack.c.l.b16 %v296
  %v314 = vpack.c.b16 %v307, %v306
  %v315 = vpack.c.b16 %v309, %v308
  %v316 = vpack.c.b16 %v311, %v310
  %v317 = vpack.c.b16 %v313, %v312
  %v323 = vsel %vm77, %v297, 0
  %325 = vmatpush.bf16.msra.mxu0 0
  %326 = vmatpush.bf16.msra.mxu0 0
  %327 = vmatpush.bf16.msra.mxu0 0
  %328 = vmatpush.bf16.msra.mxu0 0
  %329 = vmatpush.bf16.msra.mxu0 %v317
  %330 = vmatpush.bf16.msra.mxu0 %v316
  %331 = vmatpush.bf16.msra.mxu0 %v315
  %332 = vmatpush.bf16.msra.mxu0 %v314
  %333 = vmatmul.bf16.gmra.mxu0 %v323
  %v334 = vpop.f32.mrf.mxu0
  %v335 = vadd.f32 0.0, %v334
  %v336 = vpop.f32.mrf.mxu0
  %337 = vdwg.mxu0
  %v338 = vadd.f32 %v277, %v335
  %v339 = vld [vmem:[%s1 + $0x5] sm:$0x1]
  %v340 = vld [vmem:[%s2 + $0x5] sm:$0x1]
  %341 = vset.pattern.permute.xlu0 5
  %342 = vperm.xlu0 %341, %v27
  %v343 = vpop.permute.xlu0 %342
  %v345 = vperm.slane %v339, 0
  %v346 = vmul.f32 %v343, %v345
  %v347 = vperm.slane %v340, 0
  %v348 = vadd.f32 %v346, %v347
  %v349 = vmax.f32 %v348, 0.0
  %v350 = vld [vmem:[%s3 + $0xa0] sm:$0xf]
  %v351 = vld [vmem:[%s3 + $0xa4] sm:$0xf]
  %v352 = vld [vmem:[%s3 + $0xa8] sm:$0xf]
  %v353 = vld [vmem:[%s3 + $0xac] sm:$0xf]
  %v354 = vld [vmem:[%s3 + $0xb0] sm:$0xf]
  %v355 = vld [vmem:[%s3 + $0xb4] sm:$0xf]
  %v356 = vld [vmem:[%s3 + $0xb8] sm:$0xf]
  %v357 = vld [vmem:[%s3 + $0xbc] sm:$0xf]
  %v358 = vpack.c.bf16 %v349, %v349
  %v367 = vunpack.c.l.b16 %v350
  %v368 = vunpack.c.l.b16 %v351
  %v369 = vunpack.c.l.b16 %v352
  %v370 = vunpack.c.l.b16 %v353
  %v371 = vunpack.c.l.b16 %v354
  %v372 = vunpack.c.l.b16 %v355
  %v373 = vunpack.c.l.b16 %v356
  %v374 = vunpack.c.l.b16 %v357
  %v375 = vpack.c.b16 %v368, %v367
  %v376 = vpack.c.b16 %v370, %v369
  %v377 = vpack.c.b16 %v372, %v371
  %v378 = vpack.c.b16 %v374, %v373
  %v384 = vsel %vm77, %v358, 0
  %386 = vmatpush.bf16.msra.mxu0 0
  %387 = vmatpush.bf16.msra.mxu0 0
  %388 = vmatpush.bf16.msra.mxu0 0
  %389 = vmatpush.bf16.msra.mxu0 0
  %390 = vmatpush.bf16.msra.mxu0 %v378
  %391 = vmatpush.bf16.msra.mxu0 %v377
  %392 = vmatpush.bf16.msra.mxu0 %v376
  %393 = vmatpush.bf16.msra.mxu0 %v375
  %394 = vmatmul.bf16.gmra.mxu0 %v384
  %v395 = vpop.f32.mrf.mxu0
  %v396 = vadd.f32 0.0, %v395
  %v397 = vpop.f32.mrf.mxu0
  %398 = vdwg.mxu0
  %v399 = vadd.f32 %v338, %v396
  %v400 = vmax.f32 %v399, 0.0
  %v401 = vpack.c.bf16 %v400, %v400
  %v402 = vld [vmem:[%s5] sm:$0xf]
  %v403 = vld [vmem:[%s5 + $0x4] sm:$0xf]
  %v404 = vld [vmem:[%s5 + $0x8] sm:$0xf]
  %v405 = vld [vmem:[%s5 + $0xc] sm:$0xf]
  %v406 = vld [vmem:[%s5 + $0x10] sm:$0xf]
  %v407 = vld [vmem:[%s5 + $0x14] sm:$0xf]
  %v408 = vld [vmem:[%s5 + $0x18] sm:$0xf]
  %v409 = vld [vmem:[%s5 + $0x1c] sm:$0xf]
  %v410 = vld [vmem:[%s6] sm:$0x1]
  %v412 = vperm.slane %v410, 0
  %v422 = vunpack.c.l.b16 %v402
  %v423 = vunpack.c.l.b16 %v403
  %v424 = vunpack.c.l.b16 %v404
  %v425 = vunpack.c.l.b16 %v405
  %v426 = vunpack.c.l.b16 %v406
  %v427 = vunpack.c.l.b16 %v407
  %v428 = vunpack.c.l.b16 %v408
  %v429 = vunpack.c.l.b16 %v409
  %v430 = vpack.c.b16 %v423, %v422
  %v431 = vpack.c.b16 %v425, %v424
  %v432 = vpack.c.b16 %v427, %v426
  %v433 = vpack.c.b16 %v429, %v428
  %v439 = vsel %vm77, %v401, 0
  %441 = vmatpush.bf16.msra.mxu0 0
  %442 = vmatpush.bf16.msra.mxu0 0
  %443 = vmatpush.bf16.msra.mxu0 0
  %444 = vmatpush.bf16.msra.mxu0 0
  %445 = vmatpush.bf16.msra.mxu0 %v433
  %446 = vmatpush.bf16.msra.mxu0 %v432
  %447 = vmatpush.bf16.msra.mxu0 %v431
  %448 = vmatpush.bf16.msra.mxu0 %v430
  %449 = vmatmul.bf16.gmra.mxu0 %v439
  %v450 = vpop.f32.mrf.mxu0
  %v451 = vadd.f32 %v412, %v450
  %v452 = vpop.f32.mrf.mxu0
  %453 = vdwg.mxu0
  %454 = vst [vmem:[%s7] sm:$0xff] %v451
  // Predicated region
  $region30: #{mlp6_forward.1} parent=0 // pred_check
    _
  $region31: #{mlp6_forward.1} parent=0 // pred_check_branch
    %456 = sbr.rel (0) target = $region33
  $region32: #{mlp6_forward.1} parent=0 // pred_region
    _
  $region33: #{mlp6_forward.1} parent=0 // pred_fallthru
    _
  // Predicated region
  $region34: #{mlp6_forward.1} parent=0 // pred_check
    _
  $region35: #{mlp6_forward.1} parent=0 // pred_check_branch
    %458 = sbr.rel (0) target = $region37
  $region36: #{mlp6_forward.1} parent=0 // pred_region
    _
  $region37: #{mlp6_forward.1} parent=0 // pred_fallthru
    _

</llo_original>
